<compile_context>
chip_gen: v7x
topology: tpu7x:2x2x1
jax: 0.10.0
libtpu: 0.0.40
codegen_flags: <defaults>
</compile_context>

<pallas_src>
import functools

import jax
import jax.numpy as jnp
from jax.experimental import pallas as pl
from jax.experimental.pallas import tpu as pltpu


def _round_up(n, m):
    return ((n + m - 1) // m) * m


def make_nlunet_forward(conv_w, conv_b, lin_w, lin_b, *, seq_len, word_dim,
                        tb=256, use_bf16=True):
    """Builds the forward function with all weight-side prep hoisted out of
    the per-call path.

    conv_w: (C, 1, W, D)  (PyTorch Conv2d layout), conv_b: (C,)
    lin_w:  (K, C)        (PyTorch Linear layout), lin_b:  (K,)
    Returns: forward(x: (B, L, D) f32) -> (B, K) f32
    """
    C, _, W, D = conv_w.shape
    K = lin_w.shape[0]
    L = seq_len
    assert D == word_dim
    T = L - W + 1                      # number of conv window positions
    LD = L * D
    TC = T * C
    Kp = _round_up(K, 128)             # lane-dense output width

    compute_dtype = jnp.bfloat16 if use_bf16 else jnp.float32

    # ---- one-time weight-side prep (hoisted) -------------------------------
    # Shift-stacked conv weight: w_big[p*D + d, t*C + c] = conv_w[c, 0, p-t, d]
    # for t <= p < t+W, else 0.  Then (x_flat @ w_big)[b, t*C + c] equals the
    # conv output (minus bias) at position t, channel c.
    wc_wdc = jnp.transpose(conv_w.reshape(C, W, D), (1, 2, 0))    # (W, D, C)
    blocks = []
    for t in range(T):
        blk = jnp.zeros((L, D, C), dtype=jnp.float32)
        blk = blk.at[t:t + W].set(wc_wdc)
        blocks.append(blk.reshape(LD, C))
    w_big = jnp.concatenate(blocks, axis=1).astype(compute_dtype)  # (LD, T*C)

    wl = jnp.transpose(lin_w, (1, 0))                              # (C, K) f32
    # Fold conv bias into the linear bias:
    #   max_t(y + bc) @ wl + bl == max_t(y) @ wl + (bc @ wl + bl)
    bl_fused = conv_b.reshape(1, C) @ wl + lin_b.reshape(1, K)     # (1, K)
    wl_p = jnp.pad(wl, ((0, 0), (0, Kp - K)))                      # (C, Kp) f32
    bl_p = jnp.pad(bl_fused, ((0, 0), (0, Kp - K)))                # (1, Kp) f32

    # ---- kernel -------------------------------------------------------------
    def kernel(x_ref, wbig_ref, wl_ref, bl_ref, out_ref):
        # One MXU pass for all T window positions of this batch tile.
        y = jnp.dot(x_ref[...], wbig_ref[...],
                    preferred_element_type=jnp.float32)            # (tb, T*C) f32
        # Max-pool over positions via static column slices (lane-aligned when
        # C is a multiple of 128; tiny lane-select cost otherwise).
        m = y[:, 0:C]
        for t in range(1, T):
            m = jnp.maximum(m, y[:, t * C:(t + 1) * C])
        # Tiny linear head (weights resident in VMEM), folded bias, lane-dense
        # (tb, Kp) store.
        out_ref[...] = (jnp.dot(m, wl_ref[...],
                                preferred_element_type=jnp.float32)
                        + bl_ref[...])

    # ---- per-call path -------------------------------------------------------
    @jax.jit
    def forward(x):
        B = x.shape[0]
        # Batch tile: multiple of 16 (bf16 sublane packing); default 256 fills
        # the v6e/v7x 256-wide MXU M dimension, 128-multiples suffice on v5e.
        tb_eff = min(tb, _round_up(B, 16))
        Bp = _round_up(B, tb_eff)
        grid = (Bp // tb_eff,)

        x_flat = jnp.pad(x, ((0, Bp - B), (0, 0), (0, 0)))
        x_flat = x_flat.reshape(Bp, LD).astype(compute_dtype)      # (Bp, LD)

        in_bytes = jnp.dtype(compute_dtype).itemsize
        cost = pl.CostEstimate(
            flops=2 * Bp * LD * TC + 2 * Bp * C * Kp,
            transcendentals=0,
            bytes_accessed=(Bp * LD * in_bytes + LD * TC * in_bytes
                            + C * Kp * 4 + Kp * 4 + Bp * Kp * 4),
        )

        out_p = pl.pallas_call(
            kernel,
            out_shape=jax.ShapeDtypeStruct((Bp, Kp), jnp.float32),
            grid=grid,
            in_specs=[
                # Batch-tiled x: last dim == full array dim (no 128-pad needed).
                pl.BlockSpec((tb_eff, LD), lambda i: (i, 0)),
                # Weights / bias: constant index_map -> resident across steps.
                pl.BlockSpec((LD, TC), lambda i: (0, 0)),
                pl.BlockSpec((C, Kp), lambda i: (0, 0)),
                pl.BlockSpec((1, Kp), lambda i: (0, 0)),
            ],
            out_specs=pl.BlockSpec((tb_eff, Kp), lambda i: (i, 0)),
            compiler_params=pltpu.CompilerParams(
                dimension_semantics=("parallel",),
                vmem_limit_bytes=32 * 1024 * 1024,
            ),
            cost_estimate=cost,
        )(x_flat, w_big, wl_p, bl_p)

        return out_p[:B, :K]

    return forward


def nlunet_reference(x, conv_w, conv_b, lin_w, lin_b):
    """Pure-JAX f32 reference of the same forward pass."""
    B, L, D = x.shape
    C, _, W, _ = conv_w.shape
    T = L - W + 1
    cols = jnp.stack([x[:, t:t + W, :].reshape(B, W * D) for t in range(T)],
                     axis=1)                                       # (B, T, W*D)
    y = jnp.einsum("btf,cf->btc", cols, conv_w.reshape(C, W * D)) + conv_b
    doc_embed = y.max(axis=1)                                      # (B, C)
    return doc_embed @ lin_w.T + lin_b                             # (B, K)


if __name__ == "__main__":
    # Shapes implied by the module: x = randn(30, 5, 10) -> B=30, L=5, D=10.
    B, L, D = 30, 5, 10
    W = 3              # window_size
    C = 16             # out_channels
    K = 3              # num classes

    key = jax.random.PRNGKey(0)
    kx, kcw, kcb, klw, klb = jax.random.split(key, 5)

    x = jax.random.normal(kx, (B, L, D), dtype=jnp.float32)
    conv_w = 0.1 * jax.random.normal(kcw, (C, 1, W, D), dtype=jnp.float32)
    conv_b = 0.1 * jax.random.normal(kcb, (C,), dtype=jnp.float32)
    lin_w = 0.1 * jax.random.normal(klw, (K, C), dtype=jnp.float32)
    lin_b = 0.1 * jax.random.normal(klb, (K,), dtype=jnp.float32)

    # tb=16 exercises a real multi-step batch grid (Bp=32 -> 2 parallel steps)
    # at the toy batch size; production default is tb=256.
    fwd = make_nlunet_forward(conv_w, conv_b, lin_w, lin_b,
                              seq_len=L, word_dim=D, tb=16, use_bf16=True)

    out = jax.block_until_ready(fwd(x))
    ref = jax.block_until_ready(nlunet_reference(x, conv_w, conv_b, lin_w, lin_b))

    assert out.shape == (B, K)
    # bf16 matmul inputs (f32 accumulation) -> loosened tolerance vs f32 ref.
    assert jnp.allclose(out, ref, atol=2e-2, rtol=2e-2), "mismatch vs reference"

    print("KERNEL_OK")
</pallas_src>

<mosaic_0001>
module attributes {stable_mosaic.version = 11 : i64} {
  func.func @kernel(%arg0: i32, %arg1: memref<16x50xbf16, #tpu.memory_space<vmem>>, %arg2: memref<50x48xbf16, #tpu.memory_space<vmem>>, %arg3: memref<16x128xf32, #tpu.memory_space<vmem>>, %arg4: memref<1x128xf32, #tpu.memory_space<vmem>>, %arg5: memref<16x128xf32, #tpu.memory_space<vmem>>) attributes {dimension_semantics = [#tpu.dimension_semantics<parallel>], iteration_bounds = array<i64: 2>, scalar_prefetch = 0 : i64, scratch_operands = 0 : i64, tpu.core_type = #tpu.core_type<tc>, window_params = [{transform_indices = @transform_0, window_bounds = array<i64: 16, 50>}, {pipeline_mode = #tpu.pipeline_mode<synchronous>, transform_indices = @transform_1, window_bounds = array<i64: 50, 48>}, {pipeline_mode = #tpu.pipeline_mode<synchronous>, transform_indices = @transform_2, window_bounds = array<i64: 16, 128>}, {pipeline_mode = #tpu.pipeline_mode<synchronous>, transform_indices = @transform_3, window_bounds = array<i64: 1, 128>}, {transform_indices = @transform_4, window_bounds = array<i64: 16, 128>}]} {
    %c0 = arith.constant 0 : index
    %c0_0 = arith.constant 0 : index
    %0 = vector.load %arg1[%c0, %c0_0] : memref<16x50xbf16, #tpu.memory_space<vmem>>, vector<16x50xbf16>
    %c0_1 = arith.constant 0 : index
    %c0_2 = arith.constant 0 : index
    %1 = vector.load %arg2[%c0_1, %c0_2] : memref<50x48xbf16, #tpu.memory_space<vmem>>, vector<50x48xbf16>
    %cst = arith.constant dense<0.000000e+00> : vector<16x48xf32>
    %2 = tpu.matmul %0, %1, %cst {dimension_numbers = #tpu.dot_dimension_numbers<[1], [0], [0], [1], [0, 0, 1, 1], [], []>} : vector<16x50xbf16>, vector<50x48xbf16>, vector<16x48xf32> -> vector<16x48xf32>
    %3 = vector.extract_strided_slice %2 {offsets = [0, 0], sizes = [16, 16], strides = [1, 1]} : vector<16x48xf32> to vector<16x16xf32>
    %4 = vector.extract_strided_slice %2 {offsets = [0, 16], sizes = [16, 16], strides = [1, 1]} : vector<16x48xf32> to vector<16x16xf32>
    %5 = arith.maximumf %3, %4 : vector<16x16xf32>
    %6 = vector.extract_strided_slice %2 {offsets = [0, 32], sizes = [16, 16], strides = [1, 1]} : vector<16x48xf32> to vector<16x16xf32>
    %7 = arith.maximumf %5, %6 : vector<16x16xf32>
    %c0_3 = arith.constant 0 : index
    %c0_4 = arith.constant 0 : index
    %8 = vector.load %arg3[%c0_3, %c0_4] : memref<16x128xf32, #tpu.memory_space<vmem>>, vector<16x128xf32>
    %cst_5 = arith.constant dense<0.000000e+00> : vector<16x128xf32>
    %9 = tpu.matmul %7, %8, %cst_5 {dimension_numbers = #tpu.dot_dimension_numbers<[1], [0], [0], [1], [0, 0, 1, 1], [], []>} : vector<16x16xf32>, vector<16x128xf32>, vector<16x128xf32> -> vector<16x128xf32>
    %c0_6 = arith.constant 0 : index
    %c0_7 = arith.constant 0 : index
    %10 = vector.load %arg4[%c0_6, %c0_7] : memref<1x128xf32, #tpu.memory_space<vmem>>, vector<1x128xf32>
    %11 = vector.broadcast %10 : vector<1x128xf32> to vector<16x128xf32>
    %12 = arith.addf %9, %11 : vector<16x128xf32>
    %c0_8 = arith.constant 0 : index
    %c0_9 = arith.constant 0 : index
    %13 = vector.load %arg5[%c0_8, %c0_9] : memref<16x128xf32, #tpu.memory_space<vmem>>, vector<16x128xf32>
    tpu.vector_store %arg5[%c0_8, %c0_9], %12 {strides = array<i32>} : memref<16x128xf32, #tpu.memory_space<vmem>>, vector<16x128xf32>,
    return
  }
  func.func @transform_0(%arg0: i32) -> (i32, i32) {
    %c0_i32 = arith.constant 0 : i32
    %c0_i32_0 = arith.constant 0 : i32
    return %arg0, %c0_i32 : i32, i32
  }
  func.func @transform_1(%arg0: i32) -> (i32, i32) {
    %c0_i32 = arith.constant 0 : i32
    %c0_i32_0 = arith.constant 0 : i32
    %c0_i32_1 = arith.constant 0 : i32
    return %c0_i32, %c0_i32_0 : i32, i32
  }
  func.func @transform_2(%arg0: i32) -> (i32, i32) {
    %c0_i32 = arith.constant 0 : i32
    %c0_i32_0 = arith.constant 0 : i32
    %c0_i32_1 = arith.constant 0 : i32
    return %c0_i32, %c0_i32_0 : i32, i32
  }
  func.func @transform_3(%arg0: i32) -> (i32, i32) {
    %c0_i32 = arith.constant 0 : i32
    %c0_i32_0 = arith.constant 0 : i32
    %c0_i32_1 = arith.constant 0 : i32
    return %c0_i32, %c0_i32_0 : i32, i32
  }
  func.func @transform_4(%arg0: i32) -> (i32, i32) {
    %c0_i32 = arith.constant 0 : i32
    %c0_i32_0 = arith.constant 0 : i32
    return %arg0, %c0_i32 : i32, i32
  }
}

</mosaic_0001>

<llo_original>
// kernel: forward.1
$region0: #{forward.1}
  #allocation0 [shape = 'u32[]', space=smem, size = 0x4, offset = 0x4, fixed_abs, tag = 'smem constant byte address 0x4 - core index']
  #allocation1 [shape = 'u32[144,128]{1,0:T(1,128)}', space=vmem, size = 0x12000, scoped, tag = 'internal scratch']
  %s0 = inlined_call_operand.vmem [shape: bf16[32,50], index: 0, kind: input, shape index: {}]
  %s1 = inlined_call_operand.vmem [shape: bf16[50,48], index: 1, kind: input, shape index: {}]
  %s2 = inlined_call_operand.vmem [shape: f32[16,128], index: 2, kind: input, shape index: {}]
  %s3 = inlined_call_operand.vmem [shape: f32[1,128], index: 3, kind: input, shape index: {}]
  %s4 = inlined_call_operand.vmem [shape: f32[32,128], index: 4, kind: output, shape index: {}]
  %s5 = sld [smem:[#allocation0]]
  $region49: #{forward.1} parent=0
    _
  %s7 = ssub.s32 1, %s5
  %s8 = scalar_select 0, %s7, %s5
  loop: start=0, step=1, limit=4
  $region2: #{forward.1} parent=0 // loop_pre_header
    _
  $region3: #{forward.1} parent=0 // loop_header
    %s10 = sphi 0, %s14
    %p11 = scmp.ge.s32.totalorder %s10, 4
    %s20 = sphi 0, %s22
    %s23 = sphi 0, %s20
    %s24 = sphi 0, %s23
    %s40 = sphi 0, %s24
    %s44 = sphi 0, %s44
    %s46 = sphi 0, %s44
    %s47 = sphi 0, %s46
    %s61 = sphi 0, %s47
    %s65 = sphi 0, %s65
    %s67 = sphi 0, %s65
    %s68 = sphi 0, %s67
    %s82 = sphi 0, %s68
    %s86 = sphi 0, %s86
    %s88 = sphi 0, %s86
    %s89 = sphi 0, %s88
    %s103 = sphi 0, %s89
    %s109 = sphi 0, %s111
    %s112 = sphi 0, %s109
    %s113 = sphi 0, %s112
    %s129 = sphi 0, %s113
  $region4: #{forward.1} parent=0 // loop_header_branch
    %13 = sbr.rel (%p11) target = $region8
  $region5: #{forward.1} parent=0 // loop_body
    %s15 = ssub.s32 %s10, 1
    %s16 = ssub.s32 %s10, 2
    %s17 = sadd.s32 %s10, 1
    %s18 = ssub.s32 %s10, %s17
    %p19 = scmp.eq.s32.totalorder %s18, 0
    %s21 = sadd.s32 %s20, 1
    %s22 = scalar_select %p19, %s20, %s21
    %p25 = pneg %p19
    %p26 = scmp.eq.s32.totalorder %s10, 1
    %p27 = por %p25, %p26
    %p28 = scmp.ne.s32.totalorder %s20, %s23
    %p29 = scmp.eq.s32.totalorder %s10, 0
    %p30 = por %p28, %p29
    %p31 = scmp.ne.s32.totalorder %s20, %s23
    %p32 = scmp.eq.s32.totalorder %s15, 1
    %p33 = por %p31, %p32
    %p34 = scmp.ne.s32.totalorder %s23, %s24
    %p35 = scmp.eq.s32.totalorder %s15, 0
    %p36 = por %p34, %p35
    %p37 = scmp.ne.s32.totalorder %s23, %s24
    %p38 = scmp.eq.s32.totalorder %s16, 1
    %p39 = por %p37, %p38
    %p41 = scmp.ne.s32.totalorder %s24, %s40
    %p42 = scmp.eq.s32.totalorder %s16, 0
    %p43 = por %p41, %p42
    %s45 = sadd.s32 %s44, 1
    %p48 = scmp.eq.s32.totalorder %s10, 1
    %p49 = scmp.ne.s32.totalorder %s44, %s46
    %p50 = scmp.eq.s32.totalorder %s10, 0
    %p51 = por %p49, %p50
    %p52 = scmp.ne.s32.totalorder %s44, %s46
    %p53 = scmp.eq.s32.totalorder %s15, 1
    %p54 = por %p52, %p53
    %p55 = scmp.ne.s32.totalorder %s46, %s47
    %p56 = scmp.eq.s32.totalorder %s15, 0
    %p57 = por %p55, %p56
    %p58 = scmp.ne.s32.totalorder %s46, %s47
    %p59 = scmp.eq.s32.totalorder %s16, 1
    %p60 = por %p58, %p59
    %p62 = scmp.ne.s32.totalorder %s47, %s61
    %p63 = scmp.eq.s32.totalorder %s16, 0
    %p64 = por %p62, %p63
    %s66 = sadd.s32 %s65, 1
    %p69 = scmp.eq.s32.totalorder %s10, 1
    %p70 = scmp.ne.s32.totalorder %s65, %s67
    %p71 = scmp.eq.s32.totalorder %s10, 0
    %p72 = por %p70, %p71
    %p73 = scmp.ne.s32.totalorder %s65, %s67
    %p74 = scmp.eq.s32.totalorder %s15, 1
    %p75 = por %p73, %p74
    %p76 = scmp.ne.s32.totalorder %s67, %s68
    %p77 = scmp.eq.s32.totalorder %s15, 0
    %p78 = por %p76, %p77
    %p79 = scmp.ne.s32.totalorder %s67, %s68
    %p80 = scmp.eq.s32.totalorder %s16, 1
    %p81 = por %p79, %p80
    %p83 = scmp.ne.s32.totalorder %s68, %s82
    %p84 = scmp.eq.s32.totalorder %s16, 0
    %p85 = por %p83, %p84
    %s87 = sadd.s32 %s86, 1
    %p90 = scmp.eq.s32.totalorder %s10, 1
    %p91 = scmp.ne.s32.totalorder %s86, %s88
    %p92 = scmp.eq.s32.totalorder %s10, 0
    %p93 = por %p91, %p92
    %p94 = scmp.ne.s32.totalorder %s86, %s88
    %p95 = scmp.eq.s32.totalorder %s15, 1
    %p96 = por %p94, %p95
    %p97 = scmp.ne.s32.totalorder %s88, %s89
    %p98 = scmp.eq.s32.totalorder %s15, 0
    %p99 = por %p97, %p98
    %p100 = scmp.ne.s32.totalorder %s88, %s89
    %p101 = scmp.eq.s32.totalorder %s16, 1
    %p102 = por %p100, %p101
    %p104 = scmp.ne.s32.totalorder %s89, %s103
    %p105 = scmp.eq.s32.totalorder %s16, 0
    %p106 = por %p104, %p105
    %s107 = ssub.s32 %s10, %s17
    %p108 = scmp.eq.s32.totalorder %s107, 0
    %s110 = sadd.s32 %s109, 1
    %s111 = scalar_select %p108, %s109, %s110
    %p114 = pneg %p108
    %p115 = scmp.eq.s32.totalorder %s10, 1
    %p116 = por %p114, %p115
    %p117 = scmp.ne.s32.totalorder %s109, %s112
    %p118 = scmp.eq.s32.totalorder %s10, 0
    %p119 = por %p117, %p118
    %p120 = scmp.ne.s32.totalorder %s109, %s112
    %p121 = scmp.eq.s32.totalorder %s15, 1
    %p122 = por %p120, %p121
    %p123 = scmp.ne.s32.totalorder %s112, %s113
    %p124 = scmp.eq.s32.totalorder %s15, 0
    %p125 = por %p123, %p124
    %p126 = scmp.ne.s32.totalorder %s112, %s113
    %p127 = scmp.eq.s32.totalorder %s16, 1
    %p128 = por %p126, %p127
    %p130 = scmp.ne.s32.totalorder %s113, %s129
    %p131 = scmp.eq.s32.totalorder %s16, 0
    %p132 = por %p130, %p131
    %p133 = scmp.le.s32.totalorder 1, %s10
    %p134 = scmp.lt.s32.totalorder %s10, 3
    %p135 = pnand %p133, %p134
    %p136 = pneg %p135
    // Predicated region
    $region9: #{forward.1} parent=5 // pred_check
      _
    $region10: #{forward.1} parent=5 // pred_check_branch
      %138 = sbr.rel (%p135) target = $region12
    $region11: #{forward.1} parent=5 // pred_region
      %s139 = ssub.s32 %s10, 1
      // Predicated region
      $region13: #{forward.1} parent=11 // pred_check
        %p140 = pneg %p57
      $region14: #{forward.1} parent=11 // pred_check_branch
        %142 = sbr.rel (%p140) target = $region16
      $region15: #{forward.1} parent=11 // pred_region
        _
      $region16: #{forward.1} parent=11 // pred_fallthru
        _
      // Predicated region
      $region17: #{forward.1} parent=11 // pred_check
        %p143 = pneg %p78
      $region18: #{forward.1} parent=11 // pred_check_branch
        %145 = sbr.rel (%p143) target = $region20
      $region19: #{forward.1} parent=11 // pred_region
        _
      $region20: #{forward.1} parent=11 // pred_fallthru
        _
      // Predicated region
      $region21: #{forward.1} parent=11 // pred_check
        %p146 = pneg %p99
      $region22: #{forward.1} parent=11 // pred_check_branch
        %148 = sbr.rel (%p146) target = $region24
      $region23: #{forward.1} parent=11 // pred_region
        _
      $region24: #{forward.1} parent=11 // pred_fallthru
        _
    $region12: #{forward.1} parent=5 // pred_fallthru
      _
    %p149 = scmp.lt.s32.totalorder %s10, 2
    // Predicated region
    $region25: #{forward.1} parent=5 // pred_check
      %p150 = pneg %p149
    $region26: #{forward.1} parent=5 // pred_check_branch
      %152 = sbr.rel (%p150) target = $region28
    $region27: #{forward.1} parent=5 // pred_region
      // Predicated region
      $region29: #{forward.1} parent=27 // pred_check
        %p153 = pneg %p30
      $region30: #{forward.1} parent=27 // pred_check_branch
        %155 = sbr.rel (%p153) target = $region32
      $region31: #{forward.1} parent=27 // pred_region
        %s156 = smul.u32 2, %s10
        %p157 = scmp.lt.s32.totalorder %s156, 3
        %s158 = scalar_select %p157, %s156, 3
        %s159 = smul.addr %s158, 4
        %s160 = scalar_lea.vmem %s0, %s159
        %s161 = smul.u32 2, %s10
      $region32: #{forward.1} parent=27 // pred_fallthru
        _
    $region28: #{forward.1} parent=5 // pred_fallthru
      _
    %p162 = scmp.le.s32.totalorder 1, %s10
    %p163 = scmp.lt.s32.totalorder %s10, 3
    %p164 = pnand %p162, %p163
    %p165 = pneg %p164
    // Predicated region
    $region33: #{forward.1} parent=5 // pred_check
      _
    $region34: #{forward.1} parent=5 // pred_check_branch
      %167 = sbr.rel (%p164) target = $region36
    $region35: #{forward.1} parent=5 // pred_region
      %s168 = ssub.s32 %s10, 1
      %s169 = smul.u32 2, %s15
      %p170 = scmp.lt.s32.totalorder %s169, 3
      %s171 = scalar_select %p170, %s169, 3
      %s172 = smul.addr %s171, 4
      %s173 = scalar_lea.vmem %s0, %s172
      %p174 = pneg %p36
      %p175 = pneg %p33
      %p176 = pneg %p57
      %p177 = pneg %p54
      %p178 = pneg %p78
      %p179 = pneg %p75
      %p180 = pneg %p99
      %p181 = pneg %p96
      %p182 = pneg %p125
      %p183 = pneg %p122
      %s184 = smul.u32 2, %s15
      %p185 = scmp.lt.s32.totalorder %s184, 3
      %s186 = scalar_select %p185, %s184, 3
      %s187 = smul.addr %s186, 8
      %s188 = scalar_lea.vmem %s4, %s187
      %s189 = smul.u32 2, %s15
      %p190 = scmp.lt.s32.totalorder %s189, 3
      %s191 = scalar_select %p190, %s189, 3
      %s192 = smul.addr %s191, 4
      %s193 = scalar_lea.vmem %s0, %s192
      %s194 = smul.u32 2, %s15
      %s195 = smul.u32 2, %s15
      %p196 = scmp.lt.s32.totalorder %s195, 3
      %s197 = scalar_select %p196, %s195, 3
      %s198 = smul.addr %s197, 8
      %s199 = scalar_lea.vmem %s4, %s198
      %s200 = smul.u32 2, %s15
      %v202 = vld [vmem:[%s193] sm:$0xf]
      %v203 = vld [vmem:[%s193 + $0x4] sm:$0xf]
      %v204 = vld [vmem:[%s1] sm:$0xf]
      %v205 = vld [vmem:[%s1 + $0x4] sm:$0xf]
      %v206 = vld [vmem:[%s1 + $0x8] sm:$0xf]
      %v207 = vld [vmem:[%s1 + $0xc] sm:$0xf]
      %v208 = vld [vmem:[%s1 + $0x10] sm:$0xf]
      %v209 = vld [vmem:[%s1 + $0x14] sm:$0xf]
      %v210 = vld [vmem:[%s1 + $0x18] sm:$0x1]
      %v213 = vunpack.c.l.b16 %v202
      %v214 = vunpack.c.l.b16 %v203
      %v215 = vpack.c.b16 %v214, %v213
      %v223 = vunpack.c.l.b16 %v204
      %v224 = vunpack.c.l.b16 %v205
      %v225 = vunpack.c.l.b16 %v206
      %v226 = vunpack.c.l.b16 %v207
      %v227 = vunpack.c.l.b16 %v208
      %v228 = vunpack.c.l.b16 %v209
      %v229 = vunpack.c.l.b16 %v210
      %v230 = vpack.c.b16 %v224, %v223
      %v231 = vpack.c.b16 %v226, %v225
      %v232 = vpack.c.b16 %v228, %v227
      %v233 = vpack.c.b16 %v229, %v229
      %vm237 = vcmask 408576
      %v239 = vsel %vm237, %v215, 0
      %vm241 = vcmask 1040384
      %v243 = vsel %vm241, %v233, 0
      %245 = vmatprep.subr.bf16.mxu0 0
      %246 = vmatpush1.bf16.msra.mxu0 %v230
      %247 = vmatprep.subr.bf16.mxu0 0
      %248 = vmatpush1.bf16.msra.mxu0 %v231
      %249 = vmatprep.subr.bf16.mxu0 0
      %250 = vmatpush1.bf16.msra.mxu0 %v232
      %251 = vmatprep.subr.bf16.mxu0 0
      %252 = vmatpush1.bf16.msra.mxu0 %v243
      %253 = vmatprep.subr.bf16.mxu0 0
      %254 = vmatpush1.bf16.msra.mxu0 0
      %255 = vmatprep.subr.bf16.mxu0 0
      %256 = vmatpush1.bf16.msra.mxu0 0
      %257 = vmatprep.subr.bf16.mxu0 0
      %258 = vmatpush1.bf16.msra.mxu0 0
      %259 = vmatprep.subr.bf16.mxu0 0
      %260 = vmatpush1.bf16.msra.mxu0 0
      %261 = vmatprep.subr.bf16.mxu0 0
      %262 = vmatpush1.bf16.msra.mxu0 0
      %263 = vmatprep.subr.bf16.mxu0 0
      %264 = vmatpush1.bf16.msra.mxu0 0
      %265 = vmatprep.subr.bf16.mxu0 0
      %266 = vmatpush1.bf16.msra.mxu0 0
      %267 = vmatprep.subr.bf16.mxu0 0
      %268 = vmatpush1.bf16.msra.mxu0 0
      %269 = vmatprep.subr.bf16.mxu0 0
      %270 = vmatpush1.bf16.msra.mxu0 0
      %271 = vmatprep.subr.bf16.mxu0 0
      %272 = vmatpush1.bf16.msra.mxu0 0
      %273 = vmatprep.subr.bf16.mxu0 0
      %274 = vmatpush1.bf16.msra.mxu0 0
      %275 = vmatprep.subr.bf16.mxu0 0
      %276 = vmatpush1.bf16.msra.mxu0 0
      %277 = vmatprep.mubr.bf16.mxu0 0
      %278 = vmatmul.mubr.bf16.gmra.mrb[0].mxu0 %v239
      %v279 = vpop.f32.mrb[0].mxu0
      %v280 = vadd.f32 0.0, %v279
      %v281 = vpop.f32.mrb[0].mxu0
      %v282 = vpop.f32.mrb[0].mxu0
      %v283 = vadd.f32 0.0, %v282
      %v284 = vpop.f32.mrb[0].mxu0
      %285 = vdwg.mxu0
      %288 = vrot.lane.b32.xlu0 %v280, 112
      %v289 = vpop.permute.xlu0 %288
      %290 = vrot.lane.b32.xlu0 %v283, 112
      %v291 = vpop.permute.xlu0 %290
      %v294 = vmax.f32 %v280, %v289
      %v295 = vmax.f32 %v283, %v291
      %296 = vrot.lane.b32.xlu0 %v280, 96
      %v297 = vpop.permute.xlu0 %296
      %298 = vrot.lane.b32.xlu0 %v283, 96
      %v299 = vpop.permute.xlu0 %298
      %v302 = vmax.f32 %v294, %v297
      %v303 = vmax.f32 %v295, %v299
      %v304 = vld [vmem:[%s2] sm:$0xff]
      %v305 = vld [vmem:[%s2 + $0x8] sm:$0xff]
      %v306 = vld [vmem:[%s3] sm:$0x1]
      %v308 = vlaneseq
      %v309 = vshrl.u32 %v308, 7
      %v310 = vsub.s32 0, %v309
      %v311 = vrot.slane %v306, %v310
      %vm313 = vcmask 130048
      %v315 = vsel %vm313, %v302, 0
      %v318 = vsel %vm313, %v303, 0
      %320 = vmatprep.subr.mxu0 0.0
      %321 = vmatpush1.msra.mxu0 %v304
      %322 = vmatprep.subr.mxu0 0.0
      %323 = vmatpush1.msra.mxu0 %v305
      %324 = vmatprep.subr.mxu0 0.0
      %325 = vmatpush1.msra.mxu0 0.0
      %326 = vmatprep.subr.mxu0 0.0
      %327 = vmatpush1.msra.mxu0 0.0
      %328 = vmatprep.subr.mxu0 0.0
      %329 = vmatpush1.msra.mxu0 0.0
      %330 = vmatprep.subr.mxu0 0.0
      %331 = vmatpush1.msra.mxu0 0.0
      %332 = vmatprep.subr.mxu0 0.0
      %333 = vmatpush1.msra.mxu0 0.0
      %334 = vmatprep.subr.mxu0 0.0
      %335 = vmatpush1.msra.mxu0 0.0
      %336 = vmatprep.subr.mxu0 0.0
      %337 = vmatpush1.msra.mxu0 0.0
      %338 = vmatprep.subr.mxu0 0.0
      %339 = vmatpush1.msra.mxu0 0.0
      %340 = vmatprep.subr.mxu0 0.0
      %341 = vmatpush1.msra.mxu0 0.0
      %342 = vmatprep.subr.mxu0 0.0
      %343 = vmatpush1.msra.mxu0 0.0
      %344 = vmatprep.subr.mxu0 0.0
      %345 = vmatpush1.msra.mxu0 0.0
      %346 = vmatprep.subr.mxu0 0.0
      %347 = vmatpush1.msra.mxu0 0.0
      %348 = vmatprep.subr.mxu0 0.0
      %349 = vmatpush1.msra.mxu0 0.0
      %350 = vmatprep.subr.mxu0 0.0
      %351 = vmatpush1.msra.mxu0 0.0
      %352 = vmatprep.subr.mxu0 0.0
      %353 = vmatpush1.msra.mxu0 0.0
      %354 = vmatprep.subr.mxu0 0.0
      %355 = vmatpush1.msra.mxu0 0.0
      %356 = vmatprep.subr.mxu0 0.0
      %357 = vmatpush1.msra.mxu0 0.0
      %358 = vmatprep.subr.mxu0 0.0
      %359 = vmatpush1.msra.mxu0 0.0
      %360 = vmatprep.subr.mxu0 0.0
      %361 = vmatpush1.msra.mxu0 0.0
      %362 = vmatprep.subr.mxu0 0.0
      %363 = vmatpush1.msra.mxu0 0.0
      %364 = vmatprep.subr.mxu0 0.0
      %365 = vmatpush1.msra.mxu0 0.0
      %366 = vmatprep.subr.mxu0 0.0
      %367 = vmatpush1.msra.mxu0 0.0
      %368 = vmatprep.subr.mxu0 0.0
      %369 = vmatpush1.msra.mxu0 0.0
      %370 = vmatprep.subr.mxu0 0.0
      %371 = vmatpush1.msra.mxu0 0.0
      %372 = vmatprep.subr.mxu0 0.0
      %373 = vmatpush1.msra.mxu0 0.0
      %374 = vmatprep.subr.mxu0 0.0
      %375 = vmatpush1.msra.mxu0 0.0
      %376 = vmatprep.subr.mxu0 0.0
      %377 = vmatpush1.msra.mxu0 0.0
      %378 = vmatprep.subr.mxu0 0.0
      %379 = vmatpush1.msra.mxu0 0.0
      %380 = vmatprep.subr.mxu0 0.0
      %381 = vmatpush1.msra.mxu0 0.0
      %382 = vmatprep.subr.mxu0 0.0
      %383 = vmatpush1.msra.mxu0 0.0
      %384 = vmatprep.mubr.f32.mxu0 0.0
      %385 = vmatmul.mubr.f32.gmra.mrb[0].mxu0 %v315
      %v386 = vpop.f32.mrb[0].mxu0
      %v387 = vadd.f32 %v311, %v386
      %v388 = vpop.f32.mrb[0].mxu0
      %389 = vmatprep.mubr.f32.mxu0 0.0
      %390 = vmatmul.mubr.f32.gmra.mrb[0].mxu0 %v318
      %v391 = vpop.f32.mrb[0].mxu0
      %v392 = vadd.f32 %v311, %v391
      %v393 = vpop.f32.mrb[0].mxu0
      %394 = vdwg.mxu0
      %395 = vst [vmem:[%s199] sm:$0xff] %v387
      %396 = vst [vmem:[%s199 + $0x8] sm:$0xff] %v392
      %s397 = smul.u32 2, %s15
      %p398 = scmp.lt.s32.totalorder %s397, 3
      %s399 = scalar_select %p398, %s397, 3
      %s400 = smul.addr %s399, 8
      %s401 = scalar_lea.vmem %s4, %s400
      // Predicated region
      $region37: #{forward.1} parent=35 // pred_check
        %p402 = pneg %p122
      $region38: #{forward.1} parent=35 // pred_check_branch
        %404 = sbr.rel (%p402) target = $region40
      $region39: #{forward.1} parent=35 // pred_region
        %s405 = smul.u32 2, %s15
      $region40: #{forward.1} parent=35 // pred_fallthru
        _
    $region36: #{forward.1} parent=5 // pred_fallthru
      _
    %p406 = scmp.le.s32.totalorder 2, %s10
    // Predicated region
    $region41: #{forward.1} parent=5 // pred_check
      %p407 = pneg %p406
    $region42: #{forward.1} parent=5 // pred_check_branch
      %409 = sbr.rel (%p407) target = $region44
    $region43: #{forward.1} parent=5 // pred_region
      %s410 = ssub.s32 %s10, 2
      // Predicated region
      $region45: #{forward.1} parent=43 // pred_check
        %p411 = pneg %p128
      $region46: #{forward.1} parent=43 // pred_check_branch
        %413 = sbr.rel (%p411) target = $region48
      $region47: #{forward.1} parent=43 // pred_region
        %s414 = smul.u32 2, %s16
        %p415 = scmp.lt.s32.totalorder %s414, 3
        %s416 = scalar_select %p415, %s414, 3
        %s417 = smul.addr %s416, 8
        %s418 = scalar_lea.vmem %s4, %s417
      $region48: #{forward.1} parent=43 // pred_fallthru
        _
    $region44: #{forward.1} parent=5 // pred_fallthru
      _
  $region6: #{forward.1} parent=0 // loop_footer
    %s14 = sadd.s32 1, %s10
  $region7: #{forward.1} parent=0 // loop_footer_branch
    %9 = sbr.rel target = $region3
  $region8: #{forward.1} parent=0 // loop_exit
    _

</llo_original>
